<compile_context>
chip_gen: v7x
topology: tpu7x:2x2x1
jax: 0.10.0
libtpu: 0.0.40
codegen_flags: <defaults>
</compile_context>

<pallas_src>
import jax
import jax.numpy as jnp
from jax.experimental import pallas as pl
from jax.experimental.pallas import tpu as pltpu

KSIZE = 3


def conv_relu_kernel(x_ref, w_ref, o_ref):
    # x_ref: (1, 1, TH+2, W, 3*Cin) bf16  kw-folded, halo'd input strip
    # w_ref: (3, 3*Cin, Cout)       bf16  weights, [kh, kw*Cin+ci, co]
    # o_ref: (1, 1, TH, W, Cout)    f32   output strip
    TH = o_ref.shape[2]
    W = o_ref.shape[3]
    Cout = o_ref.shape[4]
    K = w_ref.shape[1]

    acc = jnp.zeros((TH * W, Cout), dtype=jnp.float32)
    # 3 MXU dots with K=192 (kw already folded into the contraction); the kh slice
    # is along a leading axis so there is no per-tap VMEM relayout.
    for kh in range(KSIZE):
        lhs = x_ref[0, 0, kh:kh + TH].reshape(TH * W, K)          # bf16, (TH*W, 192)
        acc = acc + jnp.dot(lhs, w_ref[kh],
                            preferred_element_type=jnp.float32)   # fp32 accumulate
    out = jnp.maximum(acc, 0.0).reshape(TH, W, Cout)
    o_ref[0, 0] = out.astype(o_ref.dtype)


def conv_relu_block(x_nchw, w_oihw, *, row_tile=8):
    """x_nchw: (N, Cin, H, W) float32; w_oihw: (Cout, Cin, 3, 3) float32."""
    N, Cin, H, W = x_nchw.shape
    Cout = w_oihw.shape[0]
    TH = row_tile if (H % row_tile == 0) else H     # rows per strip (keeps acc small)
    S = H // TH
    K = KSIZE * Cin                                  # folded contraction depth = 192

    # ---- one-time layout / dtype prep in plain JAX (amortize across a full stack) ----
    x_nhwc = jnp.transpose(x_nchw.astype(jnp.bfloat16), (0, 2, 3, 1))   # (N, H, W, Cin)
    x_pad = jnp.pad(x_nhwc, ((0, 0), (1, 1), (1, 1), (0, 0)))           # (N, H+2, W+2, Cin)
    # Halo'd, kw-folded row strips: (N, S, TH+2, W, 3*Cin), channel index = kw*Cin + ci.
    xstrips = jnp.stack(
        [jnp.concatenate(
            [x_pad[:, s * TH:s * TH + TH + 2, kw:kw + W, :] for kw in range(KSIZE)],
            axis=-1)
         for s in range(S)],
        axis=1)
    # Weights (Cout, Cin, 3, 3) -> (kh, kw*Cin+ci, Cout), bf16.
    w_k = jnp.transpose(w_oihw, (2, 3, 1, 0)).reshape(KSIZE, K, Cout).astype(jnp.bfloat16)

    out = pl.pallas_call(
        conv_relu_kernel,
        out_shape=jax.ShapeDtypeStruct((N, S, TH, W, Cout), jnp.float32),
        grid_spec=pltpu.PrefetchScalarGridSpec(
            num_scalar_prefetch=0,
            grid=(N, S),
            in_specs=[
                pl.BlockSpec((1, 1, TH + 2, W, K), lambda n, s: (n, s, 0, 0, 0)),
                pl.BlockSpec((KSIZE, K, Cout), lambda n, s: (0, 0, 0)),
            ],
            out_specs=pl.BlockSpec((1, 1, TH, W, Cout), lambda n, s: (n, s, 0, 0, 0)),
        ),
        compiler_params=pltpu.CompilerParams(
            # both axes independent -> v7x can shard strips over its 2 TensorCores
            dimension_semantics=("parallel", "parallel"),
            # raise the scoped-VMEM ceiling (v5e default ~16 MiB) so double-buffering
            # of larger strips is never dropped; safe on v6e/v7x as well.
            vmem_limit_bytes=32 * 1024 * 1024),
    )(xstrips, w_k)

    # (N, S, TH, W, Cout) -> (N, Cout, H, W)
    out = jnp.transpose(out, (0, 4, 1, 2, 3)).reshape(N, Cout, H, W)
    return out.astype(x_nchw.dtype)


if __name__ == "__main__":
    key = jax.random.PRNGKey(0)
    k_x, k_w = jax.random.split(key)

    # Module fixes channels at 64; keep batch/spatial small.
    N, C, H, W = 2, 64, 16, 16
    x = jax.random.normal(k_x, (N, C, H, W), dtype=jnp.float32)

    # Deterministic VDSR-style init: N(0, sqrt(2 / (k*k*Cout)))
    std = (2.0 / (KSIZE * KSIZE * C)) ** 0.5
    w = jax.random.normal(k_w, (C, C, KSIZE, KSIZE), dtype=jnp.float32) * std

    out = conv_relu_block(x, w)
    out = jax.block_until_ready(out)

    # Reference: XLA fp32 conv + relu (NCHW / OIHW). The kernel feeds the MXU bf16
    # operands (fp32 accumulation), so the tolerance is loosened accordingly.
    ref = jax.lax.conv_general_dilated(
        x, w, window_strides=(1, 1), padding=((1, 1), (1, 1)),
        dimension_numbers=("NCHW", "OIHW", "NCHW"))
    ref = jnp.maximum(ref, 0.0)

    assert out.shape == (N, C, H, W)
    assert jnp.allclose(out, ref, atol=5e-2, rtol=5e-2), (
        float(jnp.max(jnp.abs(out - ref))))

    print("KERNEL_OK")
</pallas_src>

<mosaic_0001>
module attributes {stable_mosaic.version = 11 : i64} {
  func.func @conv_relu_kernel(%arg0: i32, %arg1: i32, %arg2: memref<1x1x10x16x192xbf16, #tpu.memory_space<vmem>>, %arg3: memref<3x192x64xbf16, #tpu.memory_space<vmem>>, %arg4: memref<1x1x8x16x64xf32, #tpu.memory_space<vmem>>) attributes {dimension_semantics = [#tpu.dimension_semantics<parallel>, #tpu.dimension_semantics<parallel>], iteration_bounds = array<i64: 2, 2>, scalar_prefetch = 0 : i64, scratch_operands = 0 : i64, tpu.core_type = #tpu.core_type<tc>, window_params = [{transform_indices = @transform_0, window_bounds = array<i64: 1, 1, 10, 16, 192>}, {pipeline_mode = #tpu.pipeline_mode<synchronous>, transform_indices = @transform_1, window_bounds = array<i64: 3, 192, 64>}, {transform_indices = @transform_2, window_bounds = array<i64: 1, 1, 8, 16, 64>}]} {
    %cst = arith.constant 0.000000e+00 : f32
    %0 = vector.broadcast %cst : f32 to vector<128x64xf32>
    %c0 = arith.constant 0 : index
    %c0_0 = arith.constant 0 : index
    %c0_1 = arith.constant 0 : index
    %c0_2 = arith.constant 0 : index
    %c0_3 = arith.constant 0 : index
    %1 = vector.load %arg2[%c0, %c0_0, %c0_1, %c0_2, %c0_3] : memref<1x1x10x16x192xbf16, #tpu.memory_space<vmem>>, vector<1x1x8x16x192xbf16>
    %2 = vector.shape_cast %1 : vector<1x1x8x16x192xbf16> to vector<8x16x192xbf16>
    %3 = vector.shape_cast %2 : vector<8x16x192xbf16> to vector<128x192xbf16>
    %c0_4 = arith.constant 0 : index
    %c0_5 = arith.constant 0 : index
    %c0_6 = arith.constant 0 : index
    %4 = vector.load %arg3[%c0_4, %c0_5, %c0_6] : memref<3x192x64xbf16, #tpu.memory_space<vmem>>, vector<1x192x64xbf16>
    %5 = vector.shape_cast %4 : vector<1x192x64xbf16> to vector<192x64xbf16>
    %cst_7 = arith.constant dense<0.000000e+00> : vector<128x64xf32>
    %6 = tpu.matmul %3, %5, %cst_7 {dimension_numbers = #tpu.dot_dimension_numbers<[1], [0], [0], [1], [0, 0, 1, 1], [], []>} : vector<128x192xbf16>, vector<192x64xbf16>, vector<128x64xf32> -> vector<128x64xf32>
    %7 = arith.addf %0, %6 : vector<128x64xf32>
    %c0_8 = arith.constant 0 : index
    %c0_9 = arith.constant 0 : index
    %c1 = arith.constant 1 : index
    %c0_10 = arith.constant 0 : index
    %c0_11 = arith.constant 0 : index
    %8 = vector.load %arg2[%c0_8, %c0_9, %c1, %c0_10, %c0_11] : memref<1x1x10x16x192xbf16, #tpu.memory_space<vmem>>, vector<1x1x8x16x192xbf16>
    %9 = vector.shape_cast %8 : vector<1x1x8x16x192xbf16> to vector<8x16x192xbf16>
    %10 = vector.shape_cast %9 : vector<8x16x192xbf16> to vector<128x192xbf16>
    %c1_12 = arith.constant 1 : index
    %c0_13 = arith.constant 0 : index
    %c0_14 = arith.constant 0 : index
    %11 = vector.load %arg3[%c1_12, %c0_13, %c0_14] : memref<3x192x64xbf16, #tpu.memory_space<vmem>>, vector<1x192x64xbf16>
    %12 = vector.shape_cast %11 : vector<1x192x64xbf16> to vector<192x64xbf16>
    %cst_15 = arith.constant dense<0.000000e+00> : vector<128x64xf32>
    %13 = tpu.matmul %10, %12, %cst_15 {dimension_numbers = #tpu.dot_dimension_numbers<[1], [0], [0], [1], [0, 0, 1, 1], [], []>} : vector<128x192xbf16>, vector<192x64xbf16>, vector<128x64xf32> -> vector<128x64xf32>
    %14 = arith.addf %7, %13 : vector<128x64xf32>
    %c0_16 = arith.constant 0 : index
    %c0_17 = arith.constant 0 : index
    %c2 = arith.constant 2 : index
    %c0_18 = arith.constant 0 : index
    %c0_19 = arith.constant 0 : index
    %15 = vector.load %arg2[%c0_16, %c0_17, %c2, %c0_18, %c0_19] : memref<1x1x10x16x192xbf16, #tpu.memory_space<vmem>>, vector<1x1x8x16x192xbf16>
    %16 = vector.shape_cast %15 : vector<1x1x8x16x192xbf16> to vector<8x16x192xbf16>
    %17 = vector.shape_cast %16 : vector<8x16x192xbf16> to vector<128x192xbf16>
    %c2_20 = arith.constant 2 : index
    %c0_21 = arith.constant 0 : index
    %c0_22 = arith.constant 0 : index
    %18 = vector.load %arg3[%c2_20, %c0_21, %c0_22] : memref<3x192x64xbf16, #tpu.memory_space<vmem>>, vector<1x192x64xbf16>
    %19 = vector.shape_cast %18 : vector<1x192x64xbf16> to vector<192x64xbf16>
    %cst_23 = arith.constant dense<0.000000e+00> : vector<128x64xf32>
    %20 = tpu.matmul %17, %19, %cst_23 {dimension_numbers = #tpu.dot_dimension_numbers<[1], [0], [0], [1], [0, 0, 1, 1], [], []>} : vector<128x192xbf16>, vector<192x64xbf16>, vector<128x64xf32> -> vector<128x64xf32>
    %21 = arith.addf %14, %20 : vector<128x64xf32>
    %cst_24 = arith.constant 0.000000e+00 : f32
    %22 = vector.broadcast %cst_24 : f32 to vector<128x64xf32>
    %23 = arith.maximumf %21, %22 : vector<128x64xf32>
    %24 = vector.shape_cast %23 : vector<128x64xf32> to vector<8x16x64xf32>
    %c0_25 = arith.constant 0 : index
    %c0_26 = arith.constant 0 : index
    %c0_27 = arith.constant 0 : index
    %c0_28 = arith.constant 0 : index
    %c0_29 = arith.constant 0 : index
    %25 = vector.load %arg4[%c0_25, %c0_26, %c0_27, %c0_28, %c0_29] : memref<1x1x8x16x64xf32, #tpu.memory_space<vmem>>, vector<1x1x8x16x64xf32>
    %26 = vector.shape_cast %25 : vector<1x1x8x16x64xf32> to vector<8x16x64xf32>
    %27 = vector.shape_cast %24 : vector<8x16x64xf32> to vector<1x1x8x16x64xf32>
    tpu.vector_store %arg4[%c0_25, %c0_26, %c0_27, %c0_28, %c0_29], %27 {strides = array<i32>} : memref<1x1x8x16x64xf32, #tpu.memory_space<vmem>>, vector<1x1x8x16x64xf32>,
    return
  }
  func.func @transform_0(%arg0: i32, %arg1: i32) -> (i32, i32, i32, i32, i32) {
    %c0_i32 = arith.constant 0 : i32
    %c0_i32_0 = arith.constant 0 : i32
    %c0_i32_1 = arith.constant 0 : i32
    %c0_i32_2 = arith.constant 0 : i32
    return %arg0, %arg1, %c0_i32, %c0_i32_0, %c0_i32_1 : i32, i32, i32, i32, i32
  }
  func.func @transform_1(%arg0: i32, %arg1: i32) -> (i32, i32, i32) {
    %c0_i32 = arith.constant 0 : i32
    %c0_i32_0 = arith.constant 0 : i32
    %c0_i32_1 = arith.constant 0 : i32
    %c0_i32_2 = arith.constant 0 : i32
    return %c0_i32, %c0_i32_0, %c0_i32_1 : i32, i32, i32
  }
  func.func @transform_2(%arg0: i32, %arg1: i32) -> (i32, i32, i32, i32, i32) {
    %c0_i32 = arith.constant 0 : i32
    %c0_i32_0 = arith.constant 0 : i32
    %c0_i32_1 = arith.constant 0 : i32
    %c0_i32_2 = arith.constant 0 : i32
    return %arg0, %arg1, %c0_i32, %c0_i32_0, %c0_i32_1 : i32, i32, i32, i32, i32
  }
}

</mosaic_0001>

<llo_original>
// kernel: tpu_custom_call.1
$region0: #{tpu_custom_call.1}
  #allocation0 [shape = 'u32[]', space=smem, size = 0x4, offset = 0x4, fixed_abs, tag = 'smem constant byte address 0x4 - core index']
  #allocation1 [shape = 'u32[144,128]{1,0:T(1,128)}', space=vmem, size = 0x12000, scoped, tag = 'internal scratch']
  %s0 = inlined_call_operand.hbm [shape: bf16[2,2,10,16,192], index: 0, kind: input, shape index: {}]
  %s1 = inlined_call_operand.vmem [shape: bf16[3,192,64], index: 1, kind: input, shape index: {}]
  %s2 = inlined_call_operand.hbm [shape: f32[2,2,8,16,64], index: 2, kind: output, shape index: {}]
  %s3 = sld [smem:[#allocation0]]
  $region45: #{tpu_custom_call.1} parent=0
    _
  %s5 = ssub.s32 1, %s3
  %s6 = scalar_select 0, %s5, %s3
  $region1: #{tpu_custom_call.1} parent=0
    #allocation2 [shape = 'u8[163840]{0}', space=vmem, size = 0x28000, scoped, tag = 'input window, operand 0']
    #allocation3 [shape = 's32[2]{0}', space=sflag, size = 0x8, scoped, tag = 'scoped memory for tpu_custom_call.1']
    #allocation4 [shape = 's32[2]{0}', space=sflag, size = 0x8, scoped, tag = 'scoped memory for tpu_custom_call.1']
    #allocation5 [shape = 'u8[131072]{0}', space=vmem, size = 0x20000, scoped, tag = 'output window, operand 0']
    %7 = vsyncpa [#allocation3], 0
    %s8 = scalar_lea.sflag [#allocation3], 1
    %9 = vsyncpa %s8, 0
    %10 = vsyncpa [#allocation4], 0
    %s11 = scalar_lea.sflag [#allocation4], 1
    %12 = vsyncpa %s11, 0
    loop: start=0, step=1, limit=6
    $region2: #{tpu_custom_call.1} parent=1 // loop_pre_header
      _
    $region3: #{tpu_custom_call.1} parent=1 // loop_header
      %s14 = sphi 0, %s18
      %p15 = scmp.ge.s32.totalorder %s14, 6
      %s21 = sphi 0, %s33
      %s22 = sphi 0, %s29
      %s23 = sphi 0, %s21
      %s24 = sphi 0, %s22
      %s25 = sphi 0, %s23
      %s26 = sphi 0, %s24
      %s38 = sphi 0, %s40
      %s41 = sphi 0, %s38
      %s42 = sphi 0, %s41
      %s58 = sphi 0, %s42
      %s62 = sphi 0, %s62
      %s64 = sphi 0, %s62
      %s65 = sphi 0, %s64
      %s79 = sphi 0, %s65
      %s87 = sphi 0, %s89
      %s90 = sphi 0, %s87
      %s91 = sphi 0, %s90
      %s107 = sphi 0, %s91
    $region4: #{tpu_custom_call.1} parent=1 // loop_header_branch
      %17 = sbr.rel (%p15) target = $region8
    $region5: #{tpu_custom_call.1} parent=1 // loop_body
      %s19 = ssub.s32 %s14, 1
      %s20 = ssub.s32 %s14, 2
      %s27 = sadd.s32 1, %s22
      %p28 = scmp.ge.s32.totalorder %s27, 2
      %s29 = scalar_select %p28, 0, %s27
      %s30 = sadd.s32 1, %s21
      %s31 = scalar_select %p28, %s30, %s21
      %p32 = scmp.ge.s32.totalorder %s31, 2
      %s33 = scalar_select %p32, 0, %s31
      %s34 = ssub.s32 %s21, %s33
      %s35 = ssub.s32 %s22, %s29
      %s36 = sor.u32 %s34, %s35
      %p37 = scmp.eq.s32.totalorder %s36, 0
      %s39 = sadd.s32 %s38, 1
      %s40 = scalar_select %p37, %s38, %s39
      %p43 = pneg %p37
      %p44 = scmp.eq.s32.totalorder %s14, 3
      %p45 = por %p43, %p44
      %p46 = scmp.ne.s32.totalorder %s38, %s41
      %p47 = scmp.eq.s32.totalorder %s14, 0
      %p48 = por %p46, %p47
      %p49 = scmp.ne.s32.totalorder %s38, %s41
      %p50 = scmp.eq.s32.totalorder %s19, 3
      %p51 = por %p49, %p50
      %p52 = scmp.ne.s32.totalorder %s41, %s42
      %p53 = scmp.eq.s32.totalorder %s19, 0
      %p54 = por %p52, %p53
      %p55 = scmp.ne.s32.totalorder %s41, %s42
      %p56 = scmp.eq.s32.totalorder %s20, 3
      %p57 = por %p55, %p56
      %p59 = scmp.ne.s32.totalorder %s42, %s58
      %p60 = scmp.eq.s32.totalorder %s20, 0
      %p61 = por %p59, %p60
      %s63 = sadd.s32 %s62, 1
      %p66 = scmp.eq.s32.totalorder %s14, 3
      %p67 = scmp.ne.s32.totalorder %s62, %s64
      %p68 = scmp.eq.s32.totalorder %s14, 0
      %p69 = por %p67, %p68
      %p70 = scmp.ne.s32.totalorder %s62, %s64
      %p71 = scmp.eq.s32.totalorder %s19, 3
      %p72 = por %p70, %p71
      %p73 = scmp.ne.s32.totalorder %s64, %s65
      %p74 = scmp.eq.s32.totalorder %s19, 0
      %p75 = por %p73, %p74
      %p76 = scmp.ne.s32.totalorder %s64, %s65
      %p77 = scmp.eq.s32.totalorder %s20, 3
      %p78 = por %p76, %p77
      %p80 = scmp.ne.s32.totalorder %s65, %s79
      %p81 = scmp.eq.s32.totalorder %s20, 0
      %p82 = por %p80, %p81
      %s83 = ssub.s32 %s21, %s33
      %s84 = ssub.s32 %s22, %s29
      %s85 = sor.u32 %s83, %s84
      %p86 = scmp.eq.s32.totalorder %s85, 0
      %s88 = sadd.s32 %s87, 1
      %s89 = scalar_select %p86, %s87, %s88
      %p92 = pneg %p86
      %p93 = scmp.eq.s32.totalorder %s14, 3
      %p94 = por %p92, %p93
      %p95 = scmp.ne.s32.totalorder %s87, %s90
      %p96 = scmp.eq.s32.totalorder %s14, 0
      %p97 = por %p95, %p96
      %p98 = scmp.ne.s32.totalorder %s87, %s90
      %p99 = scmp.eq.s32.totalorder %s19, 3
      %p100 = por %p98, %p99
      %p101 = scmp.ne.s32.totalorder %s90, %s91
      %p102 = scmp.eq.s32.totalorder %s19, 0
      %p103 = por %p101, %p102
      %p104 = scmp.ne.s32.totalorder %s90, %s91
      %p105 = scmp.eq.s32.totalorder %s20, 3
      %p106 = por %p104, %p105
      %p108 = scmp.ne.s32.totalorder %s91, %s107
      %p109 = scmp.eq.s32.totalorder %s20, 0
      %p110 = por %p108, %p109
      %p111 = scmp.le.s32.totalorder 1, %s14
      %p112 = scmp.lt.s32.totalorder %s14, 5
      %p113 = pnand %p111, %p112
      %p114 = pneg %p113
      // Predicated region
      $region9: #{tpu_custom_call.1} parent=5 // pred_check
        _
      $region10: #{tpu_custom_call.1} parent=5 // pred_check_branch
        %116 = sbr.rel (%p113) target = $region12
      $region11: #{tpu_custom_call.1} parent=5 // pred_region
        %s117 = ssub.s32 %s14, 1
        // Predicated region
        $region13: #{tpu_custom_call.1} parent=11 // pred_check
          %p118 = pneg %p75
        $region14: #{tpu_custom_call.1} parent=11 // pred_check_branch
          %120 = sbr.rel (%p118) target = $region16
        $region15: #{tpu_custom_call.1} parent=11 // pred_region
          _
        $region16: #{tpu_custom_call.1} parent=11 // pred_fallthru
          _
      $region12: #{tpu_custom_call.1} parent=5 // pred_fallthru
        _
      %p121 = scmp.lt.s32.totalorder %s14, 4
      // Predicated region
      $region17: #{tpu_custom_call.1} parent=5 // pred_check
        %p122 = pneg %p121
      $region18: #{tpu_custom_call.1} parent=5 // pred_check_branch
        %124 = sbr.rel (%p122) target = $region20
      $region19: #{tpu_custom_call.1} parent=5 // pred_region
        // Predicated region
        $region21: #{tpu_custom_call.1} parent=19 // pred_check
          %p125 = pneg %p48
        $region22: #{tpu_custom_call.1} parent=19 // pred_check_branch
          %127 = sbr.rel (%p125) target = $region24
        $region23: #{tpu_custom_call.1} parent=19 // pred_region
          %s128 = sand.u32 %s38, 1
          %s129 = scalar_lea.sflag [#allocation3], %s128
          %s130 = sand.u32 %s38, 1
          %s131 = smul.addr %s130, 160
          %s132 = scalar_lea.vmem [#allocation2], %s131
          %s134 = ssub.s32 2560, 2560
          %135 = vsyncadd %s129, %s134
          %s136 = smul.addr %s22, 40
          %s137 = smul.addr %s21, 80
          %s138 = sadd.s32 %s136, %s137
          %s139 = smul.addr %s138, 64
          %s140 = scalar_lea.hbm %s0, %s139
          %s141 = sshll.u32 %s132, 4
          %s142 = int_to_ptr.vmem [resolvable:$true] %s141
          %147 = dma.hbm_to_vmem [thread:$0]  %s140, 2560, %s142, %s129, 128, 128, 8
        $region24: #{tpu_custom_call.1} parent=19 // pred_fallthru
          _
      $region20: #{tpu_custom_call.1} parent=5 // pred_fallthru
        _
      %p148 = scmp.le.s32.totalorder 1, %s14
      %p149 = scmp.lt.s32.totalorder %s14, 5
      %p150 = pnand %p148, %p149
      %p151 = pneg %p150
      // Predicated region
      $region25: #{tpu_custom_call.1} parent=5 // pred_check
        _
      $region26: #{tpu_custom_call.1} parent=5 // pred_check_branch
        %153 = sbr.rel (%p150) target = $region28
      $region27: #{tpu_custom_call.1} parent=5 // pred_region
        %s154 = ssub.s32 %s14, 1
        %s155 = sand.u32 %s41, 1
        %s156 = scalar_lea.sflag [#allocation3], %s155
        %s157 = sand.u32 %s41, 1
        %s158 = smul.addr %s157, 160
        %s159 = scalar_lea.vmem [#allocation2], %s158
        // Predicated region
        $region29: #{tpu_custom_call.1} parent=27 // pred_check
          %p160 = pneg %p54
        $region30: #{tpu_custom_call.1} parent=27 // pred_check_branch
          %162 = sbr.rel (%p160) target = $region32
        $region31: #{tpu_custom_call.1} parent=27 // pred_region
          %163 = dma.done %s156, 2560
        $region32: #{tpu_custom_call.1} parent=27 // pred_fallthru
          _
        %s164 = sand.u32 %s41, 1
        %s165 = scalar_lea.sflag [#allocation3], %s164
        %s166 = sand.u32 %s41, 1
        %s167 = smul.addr %s166, 160
        %s168 = scalar_lea.vmem [#allocation2], %s167
        %p169 = pneg %p54
        %p170 = pneg %p51
        %p171 = pneg %p75
        %p172 = pneg %p72
        %p173 = pneg %p103
        %p174 = pneg %p100
        %s175 = sand.u32 %s90, 1
        %s176 = scalar_lea.sflag [#allocation4], %s175
        %s177 = sand.u32 %s90, 1
        %s178 = smul.addr %s177, 128
        %s179 = scalar_lea.vmem [#allocation5], %s178
        %v181 = vld [vmem:[%s159] sm:$0xff]
        %v182 = vld [vmem:[%s159 + $0x8] sm:$0xff]
        %v183 = vld [vmem:[%s159 + $0x10] sm:$0xff]
        %v184 = vld [vmem:[%s159 + $0x18] sm:$0xff]
        %v185 = vld [vmem:[%s159 + $0x20] sm:$0xff]
        %v186 = vld [vmem:[%s159 + $0x28] sm:$0xff]
        %v187 = vld [vmem:[%s159 + $0x30] sm:$0xff]
        %v188 = vld [vmem:[%s159 + $0x38] sm:$0xff]
        %v189 = vld [vmem:[%s159 + $0x40] sm:$0xff]
        %v190 = vld [vmem:[%s159 + $0x48] sm:$0xff]
        %v191 = vld [vmem:[%s159 + $0x50] sm:$0xff]
        %v192 = vld [vmem:[%s159 + $0x58] sm:$0xff]
        %v193 = vld [vmem:[%s159 + $0x60] sm:$0xff]
        %v194 = vld [vmem:[%s159 + $0x68] sm:$0xff]
        %v195 = vld [vmem:[%s159 + $0x70] sm:$0xff]
        %v196 = vld [vmem:[%s159 + $0x78] sm:$0xff]
        %v197 = vld [vmem:[%s1] sm:$0xf]
        %v198 = vld [vmem:[%s1 + $0x4] sm:$0xf]
        %v199 = vld [vmem:[%s1 + $0x8] sm:$0xf]
        %v200 = vld [vmem:[%s1 + $0xc] sm:$0xf]
        %v201 = vld [vmem:[%s1 + $0x10] sm:$0xf]
        %v202 = vld [vmem:[%s1 + $0x14] sm:$0xf]
        %v203 = vld [vmem:[%s1 + $0x18] sm:$0xf]
        %v204 = vld [vmem:[%s1 + $0x1c] sm:$0xf]
        %v205 = vld [vmem:[%s1 + $0x20] sm:$0xf]
        %v206 = vld [vmem:[%s1 + $0x24] sm:$0xf]
        %v207 = vld [vmem:[%s1 + $0x28] sm:$0xf]
        %v208 = vld [vmem:[%s1 + $0x2c] sm:$0xf]
        %v209 = vld [vmem:[%s1 + $0x30] sm:$0xf]
        %v210 = vld [vmem:[%s1 + $0x34] sm:$0xf]
        %v211 = vld [vmem:[%s1 + $0x38] sm:$0xf]
        %v212 = vld [vmem:[%s1 + $0x3c] sm:$0xf]
        %v213 = vld [vmem:[%s1 + $0x40] sm:$0xf]
        %v214 = vld [vmem:[%s1 + $0x44] sm:$0xf]
        %v215 = vld [vmem:[%s1 + $0x48] sm:$0xf]
        %v216 = vld [vmem:[%s1 + $0x4c] sm:$0xf]
        %v217 = vld [vmem:[%s1 + $0x50] sm:$0xf]
        %v218 = vld [vmem:[%s1 + $0x54] sm:$0xf]
        %v219 = vld [vmem:[%s1 + $0x58] sm:$0xf]
        %v220 = vld [vmem:[%s1 + $0x5c] sm:$0xf]
        %s221 = scalar_lea.vmem %s159, 16 [#allocation2]
        %v222 = vld [vmem:[%s221] sm:$0xff]
        %v223 = vld [vmem:[%s221 + $0x8] sm:$0xff]
        %v224 = vld [vmem:[%s221 + $0x10] sm:$0xff]
        %v225 = vld [vmem:[%s221 + $0x18] sm:$0xff]
        %v226 = vld [vmem:[%s221 + $0x20] sm:$0xff]
        %v227 = vld [vmem:[%s221 + $0x28] sm:$0xff]
        %v228 = vld [vmem:[%s221 + $0x30] sm:$0xff]
        %v229 = vld [vmem:[%s221 + $0x38] sm:$0xff]
        %v230 = vld [vmem:[%s221 + $0x40] sm:$0xff]
        %v231 = vld [vmem:[%s221 + $0x48] sm:$0xff]
        %v232 = vld [vmem:[%s221 + $0x50] sm:$0xff]
        %v233 = vld [vmem:[%s221 + $0x58] sm:$0xff]
        %v234 = vld [vmem:[%s221 + $0x60] sm:$0xff]
        %v235 = vld [vmem:[%s221 + $0x68] sm:$0xff]
        %v236 = vld [vmem:[%s221 + $0x70] sm:$0xff]
        %v237 = vld [vmem:[%s221 + $0x78] sm:$0xff]
        %s238 = scalar_lea.vmem %s1, 96
        %v239 = vld [vmem:[%s238] sm:$0xf]
        %v240 = vld [vmem:[%s238 + $0x4] sm:$0xf]
        %v241 = vld [vmem:[%s238 + $0x8] sm:$0xf]
        %v242 = vld [vmem:[%s238 + $0xc] sm:$0xf]
        %v243 = vld [vmem:[%s238 + $0x10] sm:$0xf]
        %v244 = vld [vmem:[%s238 + $0x14] sm:$0xf]
        %v245 = vld [vmem:[%s238 + $0x18] sm:$0xf]
        %v246 = vld [vmem:[%s238 + $0x1c] sm:$0xf]
        %v247 = vld [vmem:[%s238 + $0x20] sm:$0xf]
        %v248 = vld [vmem:[%s238 + $0x24] sm:$0xf]
        %v249 = vld [vmem:[%s238 + $0x28] sm:$0xf]
        %v250 = vld [vmem:[%s238 + $0x2c] sm:$0xf]
        %v251 = vld [vmem:[%s238 + $0x30] sm:$0xf]
        %v252 = vld [vmem:[%s238 + $0x34] sm:$0xf]
        %v253 = vld [vmem:[%s238 + $0x38] sm:$0xf]
        %v254 = vld [vmem:[%s238 + $0x3c] sm:$0xf]
        %v255 = vld [vmem:[%s238 + $0x40] sm:$0xf]
        %v256 = vld [vmem:[%s238 + $0x44] sm:$0xf]
        %v257 = vld [vmem:[%s238 + $0x48] sm:$0xf]
        %v258 = vld [vmem:[%s238 + $0x4c] sm:$0xf]
        %v259 = vld [vmem:[%s238 + $0x50] sm:$0xf]
        %v260 = vld [vmem:[%s238 + $0x54] sm:$0xf]
        %v261 = vld [vmem:[%s238 + $0x58] sm:$0xf]
        %v262 = vld [vmem:[%s238 + $0x5c] sm:$0xf]
        %v279 = vunpack.c.l.b16 %v222
        %v280 = vunpack.c.h.b16 %v222
        %v281 = vunpack.c.l.b16 %v223
        %v282 = vunpack.c.h.b16 %v223
        %v283 = vunpack.c.l.b16 %v224
        %v284 = vunpack.c.h.b16 %v224
        %v285 = vunpack.c.l.b16 %v225
        %v286 = vunpack.c.h.b16 %v225
        %v287 = vunpack.c.l.b16 %v226
        %v288 = vunpack.c.h.b16 %v226
        %v289 = vunpack.c.l.b16 %v227
        %v290 = vunpack.c.h.b16 %v227
        %v291 = vunpack.c.l.b16 %v228
        %v292 = vunpack.c.h.b16 %v228
        %v293 = vunpack.c.l.b16 %v229
        %v294 = vunpack.c.h.b16 %v229
        %v295 = vunpack.c.l.b16 %v230
        %v296 = vunpack.c.h.b16 %v230
        %v297 = vunpack.c.l.b16 %v231
        %v298 = vunpack.c.h.b16 %v231
        %v299 = vunpack.c.l.b16 %v232
        %v300 = vunpack.c.h.b16 %v232
        %v301 = vunpack.c.l.b16 %v233
        %v302 = vunpack.c.h.b16 %v233
        %v303 = vunpack.c.l.b16 %v234
        %v304 = vunpack.c.h.b16 %v234
        %v305 = vunpack.c.l.b16 %v235
        %v306 = vunpack.c.h.b16 %v235
        %v307 = vunpack.c.l.b16 %v236
        %v308 = vunpack.c.h.b16 %v236
        %v309 = vunpack.c.l.b16 %v237
        %v310 = vunpack.c.h.b16 %v237
        %v311 = vpack.c.b16 %v281, %v279
        %v312 = vpack.c.b16 %v282, %v280
        %v313 = vpack.c.b16 %v285, %v283
        %v314 = vpack.c.b16 %v286, %v284
        %v315 = vpack.c.b16 %v289, %v287
        %v316 = vpack.c.b16 %v290, %v288
        %v317 = vpack.c.b16 %v293, %v291
        %v318 = vpack.c.b16 %v294, %v292
        %v319 = vpack.c.b16 %v297, %v295
        %v320 = vpack.c.b16 %v298, %v296
        %v321 = vpack.c.b16 %v301, %v299
        %v322 = vpack.c.b16 %v302, %v300
        %v323 = vpack.c.b16 %v305, %v303
        %v324 = vpack.c.b16 %v306, %v304
        %v325 = vpack.c.b16 %v309, %v307
        %v326 = vpack.c.b16 %v310, %v308
        %v359 = vunpack.c.l.b16 %v239
        %v360 = vunpack.c.l.b16 %v240
        %v361 = vunpack.c.l.b16 %v241
        %v362 = vunpack.c.l.b16 %v242
        %v363 = vunpack.c.l.b16 %v243
        %v364 = vunpack.c.l.b16 %v244
        %v365 = vunpack.c.l.b16 %v245
        %v366 = vunpack.c.l.b16 %v246
        %v367 = vunpack.c.l.b16 %v247
        %v368 = vunpack.c.l.b16 %v248
        %v369 = vunpack.c.l.b16 %v249
        %v370 = vunpack.c.l.b16 %v250
        %v371 = vunpack.c.l.b16 %v251
        %v372 = vunpack.c.l.b16 %v252
        %v373 = vunpack.c.l.b16 %v253
        %v374 = vunpack.c.l.b16 %v254
        %v375 = vunpack.c.l.b16 %v255
        %v376 = vunpack.c.l.b16 %v256
        %v377 = vunpack.c.l.b16 %v257
        %v378 = vunpack.c.l.b16 %v258
        %v379 = vunpack.c.l.b16 %v259
        %v380 = vunpack.c.l.b16 %v260
        %v381 = vunpack.c.l.b16 %v261
        %v382 = vunpack.c.l.b16 %v262
        %v383 = vpack.c.b16 %v360, %v359
        %v384 = vpack.c.b16 %v362, %v361
        %v385 = vpack.c.b16 %v364, %v363
        %v386 = vpack.c.b16 %v366, %v365
        %v387 = vpack.c.b16 %v368, %v367
        %v388 = vpack.c.b16 %v370, %v369
        %v389 = vpack.c.b16 %v372, %v371
        %v390 = vpack.c.b16 %v374, %v373
        %v391 = vpack.c.b16 %v376, %v375
        %v392 = vpack.c.b16 %v378, %v377
        %v393 = vpack.c.b16 %v380, %v379
        %v394 = vpack.c.b16 %v382, %v381
        %vm407 = vcmask 523264
        %v409 = vsel %vm407, %v312, 0
        %v412 = vsel %vm407, %v314, 0
        %v415 = vsel %vm407, %v316, 0
        %v418 = vsel %vm407, %v318, 0
        %v421 = vsel %vm407, %v320, 0
        %v424 = vsel %vm407, %v322, 0
        %v427 = vsel %vm407, %v324, 0
        %v430 = vsel %vm407, %v326, 0
        %432 = vmatprep.subr.bf16.mxu0 0
        %433 = vmatpush1.bf16.msra.mxu0 %v383
        %434 = vmatprep.subr.bf16.mxu0 0
        %435 = vmatpush1.bf16.msra.mxu0 %v384
        %436 = vmatprep.subr.bf16.mxu0 0
        %437 = vmatpush1.bf16.msra.mxu0 %v385
        %438 = vmatprep.subr.bf16.mxu0 0
        %439 = vmatpush1.bf16.msra.mxu0 %v386
        %440 = vmatprep.subr.bf16.mxu0 0
        %441 = vmatpush1.bf16.msra.mxu0 %v387
        %442 = vmatprep.subr.bf16.mxu0 0
        %443 = vmatpush1.bf16.msra.mxu0 %v388
        %444 = vmatprep.subr.bf16.mxu0 0
        %445 = vmatpush1.bf16.msra.mxu0 %v389
        %446 = vmatprep.subr.bf16.mxu0 0
        %447 = vmatpush1.bf16.msra.mxu0 %v390
        %448 = vmatprep.subr.bf16.mxu0 0
        %449 = vmatpush1.bf16.msra.mxu0 %v391
        %450 = vmatprep.subr.bf16.mxu0 0
        %451 = vmatpush1.bf16.msra.mxu0 %v392
        %452 = vmatprep.subr.bf16.mxu0 0
        %453 = vmatpush1.bf16.msra.mxu0 %v393
        %454 = vmatprep.subr.bf16.mxu0 0
        %455 = vmatpush1.bf16.msra.mxu0 %v394
        %456 = vmatprep.subr.bf16.mxu0 0
        %457 = vmatpush1.bf16.msra.mxu0 0
        %458 = vmatprep.subr.bf16.mxu0 0
        %459 = vmatpush1.bf16.msra.mxu0 0
        %460 = vmatprep.subr.bf16.mxu0 0
        %461 = vmatpush1.bf16.msra.mxu0 0
        %462 = vmatprep.subr.bf16.mxu0 0
        %463 = vmatpush1.bf16.msra.mxu0 0
        %464 = vmatprep.mubr.bf16.mxu0 %v409
        %465 = vmatmul.mubr.bf16.gmra.mrb[0].mxu0 %v311
        %v466 = vpop.f32.mrb[0].mxu0
        %v467 = vadd.f32 0.0, %v466
        %v468 = vpop.f32.mrb[0].mxu0
        %v469 = vpop.f32.mrb[0].mxu0
        %v470 = vadd.f32 0.0, %v469
        %v471 = vpop.f32.mrb[0].mxu0
        %472 = vmatprep.mubr.bf16.mxu0 %v412
        %473 = vmatmul.mubr.bf16.gmra.mrb[0].mxu0 %v313
        %v474 = vpop.f32.mrb[0].mxu0
        %v475 = vadd.f32 0.0, %v474
        %v476 = vpop.f32.mrb[0].mxu0
        %v477 = vpop.f32.mrb[0].mxu0
        %v478 = vadd.f32 0.0, %v477
        %v479 = vpop.f32.mrb[0].mxu0
        %480 = vmatprep.mubr.bf16.mxu0 %v415
        %481 = vmatmul.mubr.bf16.gmra.mrb[0].mxu0 %v315
        %v482 = vpop.f32.mrb[0].mxu0
        %v483 = vadd.f32 0.0, %v482
        %v484 = vpop.f32.mrb[0].mxu0
        %v485 = vpop.f32.mrb[0].mxu0
        %v486 = vadd.f32 0.0, %v485
        %v487 = vpop.f32.mrb[0].mxu0
        %488 = vmatprep.mubr.bf16.mxu0 %v418
        %489 = vmatmul.mubr.bf16.gmra.mrb[0].mxu0 %v317
        %v490 = vpop.f32.mrb[0].mxu0
        %v491 = vadd.f32 0.0, %v490
        %v492 = vpop.f32.mrb[0].mxu0
        %v493 = vpop.f32.mrb[0].mxu0
        %v494 = vadd.f32 0.0, %v493
        %v495 = vpop.f32.mrb[0].mxu0
        %496 = vmatprep.mubr.bf16.mxu0 %v421
        %497 = vmatmul.mubr.bf16.gmra.mrb[0].mxu0 %v319
        %v498 = vpop.f32.mrb[0].mxu0
        %v499 = vadd.f32 0.0, %v498
        %v500 = vpop.f32.mrb[0].mxu0
        %v501 = vpop.f32.mrb[0].mxu0
        %v502 = vadd.f32 0.0, %v501
        %v503 = vpop.f32.mrb[0].mxu0
        %504 = vmatprep.mubr.bf16.mxu0 %v424
        %505 = vmatmul.mubr.bf16.gmra.mrb[0].mxu0 %v321
        %v506 = vpop.f32.mrb[0].mxu0
        %v507 = vadd.f32 0.0, %v506
        %v508 = vpop.f32.mrb[0].mxu0
        %v509 = vpop.f32.mrb[0].mxu0
        %v510 = vadd.f32 0.0, %v509
        %v511 = vpop.f32.mrb[0].mxu0
        %512 = vmatprep.mubr.bf16.mxu0 %v427
        %513 = vmatmul.mubr.bf16.gmra.mrb[0].mxu0 %v323
        %v514 = vpop.f32.mrb[0].mxu0
        %v515 = vadd.f32 0.0, %v514
        %v516 = vpop.f32.mrb[0].mxu0
        %v517 = vpop.f32.mrb[0].mxu0
        %v518 = vadd.f32 0.0, %v517
        %v519 = vpop.f32.mrb[0].mxu0
        %520 = vmatprep.mubr.bf16.mxu0 %v430
        %521 = vmatmul.mubr.bf16.gmra.mrb[0].mxu0 %v325
        %v522 = vpop.f32.mrb[0].mxu0
        %v523 = vadd.f32 0.0, %v522
        %v524 = vpop.f32.mrb[0].mxu0
        %v525 = vpop.f32.mrb[0].mxu0
        %v526 = vadd.f32 0.0, %v525
        %v527 = vpop.f32.mrb[0].mxu0
        %528 = vdwg.mxu0
        %v545 = vunpack.c.l.b16 %v181
        %v546 = vunpack.c.h.b16 %v181
        %v547 = vunpack.c.l.b16 %v182
        %v548 = vunpack.c.h.b16 %v182
        %v549 = vunpack.c.l.b16 %v183
        %v550 = vunpack.c.h.b16 %v183
        %v551 = vunpack.c.l.b16 %v184
        %v552 = vunpack.c.h.b16 %v184
        %v553 = vunpack.c.l.b16 %v185
        %v554 = vunpack.c.h.b16 %v185
        %v555 = vunpack.c.l.b16 %v186
        %v556 = vunpack.c.h.b16 %v186
        %v557 = vunpack.c.l.b16 %v187
        %v558 = vunpack.c.h.b16 %v187
        %v559 = vunpack.c.l.b16 %v188
        %v560 = vunpack.c.h.b16 %v188
        %v561 = vunpack.c.l.b16 %v189
        %v562 = vunpack.c.h.b16 %v189
        %v563 = vunpack.c.l.b16 %v190
        %v564 = vunpack.c.h.b16 %v190
        %v565 = vunpack.c.l.b16 %v191
        %v566 = vunpack.c.h.b16 %v191
        %v567 = vunpack.c.l.b16 %v192
        %v568 = vunpack.c.h.b16 %v192
        %v569 = vunpack.c.l.b16 %v193
        %v570 = vunpack.c.h.b16 %v193
        %v571 = vunpack.c.l.b16 %v194
        %v572 = vunpack.c.h.b16 %v194
        %v573 = vunpack.c.l.b16 %v195
        %v574 = vunpack.c.h.b16 %v195
        %v575 = vunpack.c.l.b16 %v196
        %v576 = vunpack.c.h.b16 %v196
        %v577 = vpack.c.b16 %v547, %v545
        %v578 = vpack.c.b16 %v548, %v546
        %v579 = vpack.c.b16 %v551, %v549
        %v580 = vpack.c.b16 %v552, %v550
        %v581 = vpack.c.b16 %v555, %v553
        %v582 = vpack.c.b16 %v556, %v554
        %v583 = vpack.c.b16 %v559, %v557
        %v584 = vpack.c.b16 %v560, %v558
        %v585 = vpack.c.b16 %v563, %v561
        %v586 = vpack.c.b16 %v564, %v562
        %v587 = vpack.c.b16 %v567, %v565
        %v588 = vpack.c.b16 %v568, %v566
        %v589 = vpack.c.b16 %v571, %v569
        %v590 = vpack.c.b16 %v572, %v570
        %v591 = vpack.c.b16 %v575, %v573
        %v592 = vpack.c.b16 %v576, %v574
        %v625 = vunpack.c.l.b16 %v197
        %v626 = vunpack.c.l.b16 %v198
        %v627 = vunpack.c.l.b16 %v199
        %v628 = vunpack.c.l.b16 %v200
        %v629 = vunpack.c.l.b16 %v201
        %v630 = vunpack.c.l.b16 %v202
        %v631 = vunpack.c.l.b16 %v203
        %v632 = vunpack.c.l.b16 %v204
        %v633 = vunpack.c.l.b16 %v205
        %v634 = vunpack.c.l.b16 %v206
        %v635 = vunpack.c.l.b16 %v207
        %v636 = vunpack.c.l.b16 %v208
        %v637 = vunpack.c.l.b16 %v209
        %v638 = vunpack.c.l.b16 %v210
        %v639 = vunpack.c.l.b16 %v211
        %v640 = vunpack.c.l.b16 %v212
        %v641 = vunpack.c.l.b16 %v213
        %v642 = vunpack.c.l.b16 %v214
        %v643 = vunpack.c.l.b16 %v215
        %v644 = vunpack.c.l.b16 %v216
        %v645 = vunpack.c.l.b16 %v217
        %v646 = vunpack.c.l.b16 %v218
        %v647 = vunpack.c.l.b16 %v219
        %v648 = vunpack.c.l.b16 %v220
        %v649 = vpack.c.b16 %v626, %v625
        %v650 = vpack.c.b16 %v628, %v627
        %v651 = vpack.c.b16 %v630, %v629
        %v652 = vpack.c.b16 %v632, %v631
        %v653 = vpack.c.b16 %v634, %v633
        %v654 = vpack.c.b16 %v636, %v635
        %v655 = vpack.c.b16 %v638, %v637
        %v656 = vpack.c.b16 %v640, %v639
        %v657 = vpack.c.b16 %v642, %v641
        %v658 = vpack.c.b16 %v644, %v643
        %v659 = vpack.c.b16 %v646, %v645
        %v660 = vpack.c.b16 %v648, %v647
        %v674 = vsel %vm407, %v578, 0
        %v677 = vsel %vm407, %v580, 0
        %v680 = vsel %vm407, %v582, 0
        %v683 = vsel %vm407, %v584, 0
        %v686 = vsel %vm407, %v586, 0
        %v689 = vsel %vm407, %v588, 0
        %v692 = vsel %vm407, %v590, 0
        %v695 = vsel %vm407, %v592, 0
        %697 = vmatprep.subr.bf16.mxu0 0
        %698 = vmatpush1.bf16.msra.mxu0 %v649
        %699 = vmatprep.subr.bf16.mxu0 0
        %700 = vmatpush1.bf16.msra.mxu0 %v650
        %701 = vmatprep.subr.bf16.mxu0 0
        %702 = vmatpush1.bf16.msra.mxu0 %v651
        %703 = vmatprep.subr.bf16.mxu0 0
        %704 = vmatpush1.bf16.msra.mxu0 %v652
        %705 = vmatprep.subr.bf16.mxu0 0
        %706 = vmatpush1.bf16.msra.mxu0 %v653
        %707 = vmatprep.subr.bf16.mxu0 0
        %708 = vmatpush1.bf16.msra.mxu0 %v654
        %709 = vmatprep.subr.bf16.mxu0 0
        %710 = vmatpush1.bf16.msra.mxu0 %v655
        %711 = vmatprep.subr.bf16.mxu0 0
        %712 = vmatpush1.bf16.msra.mxu0 %v656
        %713 = vmatprep.subr.bf16.mxu0 0
        %714 = vmatpush1.bf16.msra.mxu0 %v657
        %715 = vmatprep.subr.bf16.mxu0 0
        %716 = vmatpush1.bf16.msra.mxu0 %v658
        %717 = vmatprep.subr.bf16.mxu0 0
        %718 = vmatpush1.bf16.msra.mxu0 %v659
        %719 = vmatprep.subr.bf16.mxu0 0
        %720 = vmatpush1.bf16.msra.mxu0 %v660
        %721 = vmatprep.subr.bf16.mxu0 0
        %722 = vmatpush1.bf16.msra.mxu0 0
        %723 = vmatprep.subr.bf16.mxu0 0
        %724 = vmatpush1.bf16.msra.mxu0 0
        %725 = vmatprep.subr.bf16.mxu0 0
        %726 = vmatpush1.bf16.msra.mxu0 0
        %727 = vmatprep.subr.bf16.mxu0 0
        %728 = vmatpush1.bf16.msra.mxu0 0
        %729 = vmatprep.mubr.bf16.mxu0 %v674
        %730 = vmatmul.mubr.bf16.gmra.mrb[0].mxu0 %v577
        %v731 = vpop.f32.mrb[0].mxu0
        %v732 = vadd.f32 %v467, %v731
        %v733 = vpop.f32.mrb[0].mxu0
        %v734 = vpop.f32.mrb[0].mxu0
        %v735 = vadd.f32 %v470, %v734
        %v736 = vpop.f32.mrb[0].mxu0
        %737 = vmatprep.mubr.bf16.mxu0 %v677
        %738 = vmatmul.mubr.bf16.gmra.mrb[0].mxu0 %v579
        %v739 = vpop.f32.mrb[0].mxu0
        %v740 = vadd.f32 %v475, %v739
        %v741 = vpop.f32.mrb[0].mxu0
        %v742 = vpop.f32.mrb[0].mxu0
        %v743 = vadd.f32 %v478, %v742
        %v744 = vpop.f32.mrb[0].mxu0
        %745 = vmatprep.mubr.bf16.mxu0 %v680
        %746 = vmatmul.mubr.bf16.gmra.mrb[0].mxu0 %v581
        %v747 = vpop.f32.mrb[0].mxu0
        %v748 = vadd.f32 %v483, %v747
        %v749 = vpop.f32.mrb[0].mxu0
        %v750 = vpop.f32.mrb[0].mxu0
        %v751 = vadd.f32 %v486, %v750
        %v752 = vpop.f32.mrb[0].mxu0
        %753 = vmatprep.mubr.bf16.mxu0 %v683
        %754 = vmatmul.mubr.bf16.gmra.mrb[0].mxu0 %v583
        %v755 = vpop.f32.mrb[0].mxu0
        %v756 = vadd.f32 %v491, %v755
        %v757 = vpop.f32.mrb[0].mxu0
        %v758 = vpop.f32.mrb[0].mxu0
        %v759 = vadd.f32 %v494, %v758
        %v760 = vpop.f32.mrb[0].mxu0
        %761 = vmatprep.mubr.bf16.mxu0 %v686
        %762 = vmatmul.mubr.bf16.gmra.mrb[0].mxu0 %v585
        %v763 = vpop.f32.mrb[0].mxu0
        %v764 = vadd.f32 %v499, %v763
        %v765 = vpop.f32.mrb[0].mxu0
        %v766 = vpop.f32.mrb[0].mxu0
        %v767 = vadd.f32 %v502, %v766
        %v768 = vpop.f32.mrb[0].mxu0
        %769 = vmatprep.mubr.bf16.mxu0 %v689
        %770 = vmatmul.mubr.bf16.gmra.mrb[0].mxu0 %v587
        %v771 = vpop.f32.mrb[0].mxu0
        %v772 = vadd.f32 %v507, %v771
        %v773 = vpop.f32.mrb[0].mxu0
        %v774 = vpop.f32.mrb[0].mxu0
        %v775 = vadd.f32 %v510, %v774
        %v776 = vpop.f32.mrb[0].mxu0
        %777 = vmatprep.mubr.bf16.mxu0 %v692
        %778 = vmatmul.mubr.bf16.gmra.mrb[0].mxu0 %v589
        %v779 = vpop.f32.mrb[0].mxu0
        %v780 = vadd.f32 %v515, %v779
        %v781 = vpop.f32.mrb[0].mxu0
        %v782 = vpop.f32.mrb[0].mxu0
        %v783 = vadd.f32 %v518, %v782
        %v784 = vpop.f32.mrb[0].mxu0
        %785 = vmatprep.mubr.bf16.mxu0 %v695
        %786 = vmatmul.mubr.bf16.gmra.mrb[0].mxu0 %v591
        %v787 = vpop.f32.mrb[0].mxu0
        %v788 = vadd.f32 %v523, %v787
        %v789 = vpop.f32.mrb[0].mxu0
        %v790 = vpop.f32.mrb[0].mxu0
        %v791 = vadd.f32 %v526, %v790
        %v792 = vpop.f32.mrb[0].mxu0
        %793 = vdwg.mxu0
        %s794 = scalar_lea.vmem %s159, 32 [#allocation2]
        %v795 = vld [vmem:[%s794] sm:$0xff]
        %v796 = vld [vmem:[%s794 + $0x8] sm:$0xff]
        %v797 = vld [vmem:[%s794 + $0x10] sm:$0xff]
        %v798 = vld [vmem:[%s794 + $0x18] sm:$0xff]
        %v799 = vld [vmem:[%s794 + $0x20] sm:$0xff]
        %v800 = vld [vmem:[%s794 + $0x28] sm:$0xff]
        %v801 = vld [vmem:[%s794 + $0x30] sm:$0xff]
        %v802 = vld [vmem:[%s794 + $0x38] sm:$0xff]
        %v803 = vld [vmem:[%s794 + $0x40] sm:$0xff]
        %v804 = vld [vmem:[%s794 + $0x48] sm:$0xff]
        %v805 = vld [vmem:[%s794 + $0x50] sm:$0xff]
        %v806 = vld [vmem:[%s794 + $0x58] sm:$0xff]
        %v807 = vld [vmem:[%s794 + $0x60] sm:$0xff]
        %v808 = vld [vmem:[%s794 + $0x68] sm:$0xff]
        %v809 = vld [vmem:[%s794 + $0x70] sm:$0xff]
        %v810 = vld [vmem:[%s794 + $0x78] sm:$0xff]
        %s811 = scalar_lea.vmem %s1, 192
        %v812 = vld [vmem:[%s811] sm:$0xf]
        %v813 = vld [vmem:[%s811 + $0x4] sm:$0xf]
        %v814 = vld [vmem:[%s811 + $0x8] sm:$0xf]
        %v815 = vld [vmem:[%s811 + $0xc] sm:$0xf]
        %v816 = vld [vmem:[%s811 + $0x10] sm:$0xf]
        %v817 = vld [vmem:[%s811 + $0x14] sm:$0xf]
        %v818 = vld [vmem:[%s811 + $0x18] sm:$0xf]
        %v819 = vld [vmem:[%s811 + $0x1c] sm:$0xf]
        %v820 = vld [vmem:[%s811 + $0x20] sm:$0xf]
        %v821 = vld [vmem:[%s811 + $0x24] sm:$0xf]
        %v822 = vld [vmem:[%s811 + $0x28] sm:$0xf]
        %v823 = vld [vmem:[%s811 + $0x2c] sm:$0xf]
        %v824 = vld [vmem:[%s811 + $0x30] sm:$0xf]
        %v825 = vld [vmem:[%s811 + $0x34] sm:$0xf]
        %v826 = vld [vmem:[%s811 + $0x38] sm:$0xf]
        %v827 = vld [vmem:[%s811 + $0x3c] sm:$0xf]
        %v828 = vld [vmem:[%s811 + $0x40] sm:$0xf]
        %v829 = vld [vmem:[%s811 + $0x44] sm:$0xf]
        %v830 = vld [vmem:[%s811 + $0x48] sm:$0xf]
        %v831 = vld [vmem:[%s811 + $0x4c] sm:$0xf]
        %v832 = vld [vmem:[%s811 + $0x50] sm:$0xf]
        %v833 = vld [vmem:[%s811 + $0x54] sm:$0xf]
        %v834 = vld [vmem:[%s811 + $0x58] sm:$0xf]
        %v835 = vld [vmem:[%s811 + $0x5c] sm:$0xf]
        %v852 = vunpack.c.l.b16 %v795
        %v853 = vunpack.c.h.b16 %v795
        %v854 = vunpack.c.l.b16 %v796
        %v855 = vunpack.c.h.b16 %v796
        %v856 = vunpack.c.l.b16 %v797
        %v857 = vunpack.c.h.b16 %v797
        %v858 = vunpack.c.l.b16 %v798
        %v859 = vunpack.c.h.b16 %v798
        %v860 = vunpack.c.l.b16 %v799
        %v861 = vunpack.c.h.b16 %v799
        %v862 = vunpack.c.l.b16 %v800
        %v863 = vunpack.c.h.b16 %v800
        %v864 = vunpack.c.l.b16 %v801
        %v865 = vunpack.c.h.b16 %v801
        %v866 = vunpack.c.l.b16 %v802
        %v867 = vunpack.c.h.b16 %v802
        %v868 = vunpack.c.l.b16 %v803
        %v869 = vunpack.c.h.b16 %v803
        %v870 = vunpack.c.l.b16 %v804
        %v871 = vunpack.c.h.b16 %v804
        %v872 = vunpack.c.l.b16 %v805
        %v873 = vunpack.c.h.b16 %v805
        %v874 = vunpack.c.l.b16 %v806
        %v875 = vunpack.c.h.b16 %v806
        %v876 = vunpack.c.l.b16 %v807
        %v877 = vunpack.c.h.b16 %v807
        %v878 = vunpack.c.l.b16 %v808
        %v879 = vunpack.c.h.b16 %v808
        %v880 = vunpack.c.l.b16 %v809
        %v881 = vunpack.c.h.b16 %v809
        %v882 = vunpack.c.l.b16 %v810
        %v883 = vunpack.c.h.b16 %v810
        %v884 = vpack.c.b16 %v854, %v852
        %v885 = vpack.c.b16 %v855, %v853
        %v886 = vpack.c.b16 %v858, %v856
        %v887 = vpack.c.b16 %v859, %v857
        %v888 = vpack.c.b16 %v862, %v860
        %v889 = vpack.c.b16 %v863, %v861
        %v890 = vpack.c.b16 %v866, %v864
        %v891 = vpack.c.b16 %v867, %v865
        %v892 = vpack.c.b16 %v870, %v868
        %v893 = vpack.c.b16 %v871, %v869
        %v894 = vpack.c.b16 %v874, %v872
        %v895 = vpack.c.b16 %v875, %v873
        %v896 = vpack.c.b16 %v878, %v876
        %v897 = vpack.c.b16 %v879, %v877
        %v898 = vpack.c.b16 %v882, %v880
        %v899 = vpack.c.b16 %v883, %v881
        %v932 = vunpack.c.l.b16 %v812
        %v933 = vunpack.c.l.b16 %v813
        %v934 = vunpack.c.l.b16 %v814
        %v935 = vunpack.c.l.b16 %v815
        %v936 = vunpack.c.l.b16 %v816
        %v937 = vunpack.c.l.b16 %v817
        %v938 = vunpack.c.l.b16 %v818
        %v939 = vunpack.c.l.b16 %v819
        %v940 = vunpack.c.l.b16 %v820
        %v941 = vunpack.c.l.b16 %v821
        %v942 = vunpack.c.l.b16 %v822
        %v943 = vunpack.c.l.b16 %v823
        %v944 = vunpack.c.l.b16 %v824
        %v945 = vunpack.c.l.b16 %v825
        %v946 = vunpack.c.l.b16 %v826
        %v947 = vunpack.c.l.b16 %v827
        %v948 = vunpack.c.l.b16 %v828
        %v949 = vunpack.c.l.b16 %v829
        %v950 = vunpack.c.l.b16 %v830
        %v951 = vunpack.c.l.b16 %v831
        %v952 = vunpack.c.l.b16 %v832
        %v953 = vunpack.c.l.b16 %v833
        %v954 = vunpack.c.l.b16 %v834
        %v955 = vunpack.c.l.b16 %v835
        %v956 = vpack.c.b16 %v933, %v932
        %v957 = vpack.c.b16 %v935, %v934
        %v958 = vpack.c.b16 %v937, %v936
        %v959 = vpack.c.b16 %v939, %v938
        %v960 = vpack.c.b16 %v941, %v940
        %v961 = vpack.c.b16 %v943, %v942
        %v962 = vpack.c.b16 %v945, %v944
        %v963 = vpack.c.b16 %v947, %v946
        %v964 = vpack.c.b16 %v949, %v948
        %v965 = vpack.c.b16 %v951, %v950
        %v966 = vpack.c.b16 %v953, %v952
        %v967 = vpack.c.b16 %v955, %v954
        %v981 = vsel %vm407, %v885, 0
        %v984 = vsel %vm407, %v887, 0
        %v987 = vsel %vm407, %v889, 0
        %v990 = vsel %vm407, %v891, 0
        %v993 = vsel %vm407, %v893, 0
        %v996 = vsel %vm407, %v895, 0
        %v999 = vsel %vm407, %v897, 0
        %v1002 = vsel %vm407, %v899, 0
        %1004 = vmatprep.subr.bf16.mxu0 0
        %1005 = vmatpush1.bf16.msra.mxu0 %v956
        %1006 = vmatprep.subr.bf16.mxu0 0
        %1007 = vmatpush1.bf16.msra.mxu0 %v957
        %1008 = vmatprep.subr.bf16.mxu0 0
        %1009 = vmatpush1.bf16.msra.mxu0 %v958
        %1010 = vmatprep.subr.bf16.mxu0 0
        %1011 = vmatpush1.bf16.msra.mxu0 %v959
        %1012 = vmatprep.subr.bf16.mxu0 0
        %1013 = vmatpush1.bf16.msra.mxu0 %v960
        %1014 = vmatprep.subr.bf16.mxu0 0
        %1015 = vmatpush1.bf16.msra.mxu0 %v961
        %1016 = vmatprep.subr.bf16.mxu0 0
        %1017 = vmatpush1.bf16.msra.mxu0 %v962
        %1018 = vmatprep.subr.bf16.mxu0 0
        %1019 = vmatpush1.bf16.msra.mxu0 %v963
        %1020 = vmatprep.subr.bf16.mxu0 0
        %1021 = vmatpush1.bf16.msra.mxu0 %v964
        %1022 = vmatprep.subr.bf16.mxu0 0
        %1023 = vmatpush1.bf16.msra.mxu0 %v965
        %1024 = vmatprep.subr.bf16.mxu0 0
        %1025 = vmatpush1.bf16.msra.mxu0 %v966
        %1026 = vmatprep.subr.bf16.mxu0 0
        %1027 = vmatpush1.bf16.msra.mxu0 %v967
        %1028 = vmatprep.subr.bf16.mxu0 0
        %1029 = vmatpush1.bf16.msra.mxu0 0
        %1030 = vmatprep.subr.bf16.mxu0 0
        %1031 = vmatpush1.bf16.msra.mxu0 0
        %1032 = vmatprep.subr.bf16.mxu0 0
        %1033 = vmatpush1.bf16.msra.mxu0 0
        %1034 = vmatprep.subr.bf16.mxu0 0
        %1035 = vmatpush1.bf16.msra.mxu0 0
        %1036 = vmatprep.mubr.bf16.mxu0 %v981
        %1037 = vmatmul.mubr.bf16.gmra.mrb[0].mxu0 %v884
        %v1038 = vpop.f32.mrb[0].mxu0
        %v1039 = vadd.f32 0.0, %v1038
        %v1040 = vpop.f32.mrb[0].mxu0
        %v1041 = vpop.f32.mrb[0].mxu0
        %v1042 = vadd.f32 0.0, %v1041
        %v1043 = vpop.f32.mrb[0].mxu0
        %1044 = vmatprep.mubr.bf16.mxu0 %v984
        %1045 = vmatmul.mubr.bf16.gmra.mrb[0].mxu0 %v886
        %v1046 = vpop.f32.mrb[0].mxu0
        %v1047 = vadd.f32 0.0, %v1046
        %v1048 = vpop.f32.mrb[0].mxu0
        %v1049 = vpop.f32.mrb[0].mxu0
        %v1050 = vadd.f32 0.0, %v1049
        %v1051 = vpop.f32.mrb[0].mxu0
        %1052 = vmatprep.mubr.bf16.mxu0 %v987
        %1053 = vmatmul.mubr.bf16.gmra.mrb[0].mxu0 %v888
        %v1054 = vpop.f32.mrb[0].mxu0
        %v1055 = vadd.f32 0.0, %v1054
        %v1056 = vpop.f32.mrb[0].mxu0
        %v1057 = vpop.f32.mrb[0].mxu0
        %v1058 = vadd.f32 0.0, %v1057
        %v1059 = vpop.f32.mrb[0].mxu0
        %1060 = vmatprep.mubr.bf16.mxu0 %v990
        %1061 = vmatmul.mubr.bf16.gmra.mrb[0].mxu0 %v890
        %v1062 = vpop.f32.mrb[0].mxu0
        %v1063 = vadd.f32 0.0, %v1062
        %v1064 = vpop.f32.mrb[0].mxu0
        %v1065 = vpop.f32.mrb[0].mxu0
        %v1066 = vadd.f32 0.0, %v1065
        %v1067 = vpop.f32.mrb[0].mxu0
        %1068 = vmatprep.mubr.bf16.mxu0 %v993
        %1069 = vmatmul.mubr.bf16.gmra.mrb[0].mxu0 %v892
        %v1070 = vpop.f32.mrb[0].mxu0
        %v1071 = vadd.f32 0.0, %v1070
        %v1072 = vpop.f32.mrb[0].mxu0
        %v1073 = vpop.f32.mrb[0].mxu0
        %v1074 = vadd.f32 0.0, %v1073
        %v1075 = vpop.f32.mrb[0].mxu0
        %1076 = vmatprep.mubr.bf16.mxu0 %v996
        %1077 = vmatmul.mubr.bf16.gmra.mrb[0].mxu0 %v894
        %v1078 = vpop.f32.mrb[0].mxu0
        %v1079 = vadd.f32 0.0, %v1078
        %v1080 = vpop.f32.mrb[0].mxu0
        %v1081 = vpop.f32.mrb[0].mxu0
        %v1082 = vadd.f32 0.0, %v1081
        %v1083 = vpop.f32.mrb[0].mxu0
        %1084 = vmatprep.mubr.bf16.mxu0 %v999
        %1085 = vmatmul.mubr.bf16.gmra.mrb[0].mxu0 %v896
        %v1086 = vpop.f32.mrb[0].mxu0
        %v1087 = vadd.f32 0.0, %v1086
        %v1088 = vpop.f32.mrb[0].mxu0
        %v1089 = vpop.f32.mrb[0].mxu0
        %v1090 = vadd.f32 0.0, %v1089
        %v1091 = vpop.f32.mrb[0].mxu0
        %1092 = vmatprep.mubr.bf16.mxu0 %v1002
        %1093 = vmatmul.mubr.bf16.gmra.mrb[0].mxu0 %v898
        %v1094 = vpop.f32.mrb[0].mxu0
        %v1095 = vadd.f32 0.0, %v1094
        %v1096 = vpop.f32.mrb[0].mxu0
        %v1097 = vpop.f32.mrb[0].mxu0
        %v1098 = vadd.f32 0.0, %v1097
        %v1099 = vpop.f32.mrb[0].mxu0
        %1100 = vdwg.mxu0
        %v1101 = vadd.f32 %v732, %v1039
        %v1102 = vadd.f32 %v735, %v1042
        %v1103 = vadd.f32 %v740, %v1047
        %v1104 = vadd.f32 %v743, %v1050
        %v1105 = vadd.f32 %v748, %v1055
        %v1106 = vadd.f32 %v751, %v1058
        %v1107 = vadd.f32 %v756, %v1063
        %v1108 = vadd.f32 %v759, %v1066
        %v1109 = vadd.f32 %v764, %v1071
        %v1110 = vadd.f32 %v767, %v1074
        %v1111 = vadd.f32 %v772, %v1079
        %v1112 = vadd.f32 %v775, %v1082
        %v1113 = vadd.f32 %v780, %v1087
        %v1114 = vadd.f32 %v783, %v1090
        %v1115 = vadd.f32 %v788, %v1095
        %v1116 = vadd.f32 %v791, %v1098
        %v1117 = vmax.f32 %v1101, 0.0
        %v1118 = vmax.f32 %v1102, 0.0
        %v1119 = vmax.f32 %v1103, 0.0
        %v1120 = vmax.f32 %v1104, 0.0
        %v1121 = vmax.f32 %v1105, 0.0
        %v1122 = vmax.f32 %v1106, 0.0
        %v1123 = vmax.f32 %v1107, 0.0
        %v1124 = vmax.f32 %v1108, 0.0
        %v1125 = vmax.f32 %v1109, 0.0
        %v1126 = vmax.f32 %v1110, 0.0
        %v1127 = vmax.f32 %v1111, 0.0
        %v1128 = vmax.f32 %v1112, 0.0
        %v1129 = vmax.f32 %v1113, 0.0
        %v1130 = vmax.f32 %v1114, 0.0
        %v1131 = vmax.f32 %v1115, 0.0
        %v1132 = vmax.f32 %v1116, 0.0
        %1133 = vst.msk [vmem:[%s179] sm:$0xff] %vm407, %v1117
        %1134 = vst.msk [vmem:[%s179 + $0x8] sm:$0xff] %vm407, %v1118
        %1135 = vst.msk [vmem:[%s179 + $0x10] sm:$0xff] %vm407, %v1119
        %1136 = vst.msk [vmem:[%s179 + $0x18] sm:$0xff] %vm407, %v1120
        %1137 = vst.msk [vmem:[%s179 + $0x20] sm:$0xff] %vm407, %v1121
        %1138 = vst.msk [vmem:[%s179 + $0x28] sm:$0xff] %vm407, %v1122
        %1139 = vst.msk [vmem:[%s179 + $0x30] sm:$0xff] %vm407, %v1123
        %1140 = vst.msk [vmem:[%s179 + $0x38] sm:$0xff] %vm407, %v1124
        %1141 = vst.msk [vmem:[%s179 + $0x40] sm:$0xff] %vm407, %v1125
        %1142 = vst.msk [vmem:[%s179 + $0x48] sm:$0xff] %vm407, %v1126
        %1143 = vst.msk [vmem:[%s179 + $0x50] sm:$0xff] %vm407, %v1127
        %1144 = vst.msk [vmem:[%s179 + $0x58] sm:$0xff] %vm407, %v1128
        %1145 = vst.msk [vmem:[%s179 + $0x60] sm:$0xff] %vm407, %v1129
        %1146 = vst.msk [vmem:[%s179 + $0x68] sm:$0xff] %vm407, %v1130
        %1147 = vst.msk [vmem:[%s179 + $0x70] sm:$0xff] %vm407, %v1131
        %1148 = vst.msk [vmem:[%s179 + $0x78] sm:$0xff] %vm407, %v1132
        %s1149 = sand.u32 %s90, 1
        %s1150 = scalar_lea.sflag [#allocation4], %s1149
        %s1151 = sand.u32 %s90, 1
        %s1152 = smul.addr %s1151, 128
        %s1153 = scalar_lea.vmem [#allocation5], %s1152
        // Predicated region
        $region33: #{tpu_custom_call.1} parent=27 // pred_check
          %p1154 = pneg %p100
        $region34: #{tpu_custom_call.1} parent=27 // pred_check_branch
          %1156 = sbr.rel (%p1154) target = $region36
        $region35: #{tpu_custom_call.1} parent=27 // pred_region
          %s1158 = ssub.s32 2048, 2048
          %1159 = vsyncadd %s1150, %s1158
          %s1160 = smul.addr %s24, 16
          %s1161 = smul.addr %s23, 32
          %s1162 = sadd.s32 %s1160, %s1161
          %s1163 = smul.addr %s1162, 128
          %s1164 = scalar_lea.hbm %s2, %s1163
          %s1165 = sshll.u32 %s1153, 4
          %s1166 = int_to_ptr.vmem [resolvable:$true] %s1165
          %1171 = dma.vmem_to_hbm [thread:$0]  %s1166, 2048, %s1164, %s1150, 128, 128, 8
        $region36: #{tpu_custom_call.1} parent=27 // pred_fallthru
          _
      $region28: #{tpu_custom_call.1} parent=5 // pred_fallthru
        _
      %p1172 = scmp.le.s32.totalorder 2, %s14
      // Predicated region
      $region37: #{tpu_custom_call.1} parent=5 // pred_check
        %p1173 = pneg %p1172
      $region38: #{tpu_custom_call.1} parent=5 // pred_check_branch
        %1175 = sbr.rel (%p1173) target = $region40
      $region39: #{tpu_custom_call.1} parent=5 // pred_region
        %s1176 = ssub.s32 %s14, 2
        // Predicated region
        $region41: #{tpu_custom_call.1} parent=39 // pred_check
          %p1177 = pneg %p106
        $region42: #{tpu_custom_call.1} parent=39 // pred_check_branch
          %1179 = sbr.rel (%p1177) target = $region44
        $region43: #{tpu_custom_call.1} parent=39 // pred_region
          %s1180 = sand.u32 %s91, 1
          %s1181 = scalar_lea.sflag [#allocation4], %s1180
          %s1182 = sand.u32 %s91, 1
          %s1183 = smul.addr %s1182, 128
          %s1184 = scalar_lea.vmem [#allocation5], %s1183
          %1185 = dma.done %s1181, 2048
        $region44: #{tpu_custom_call.1} parent=39 // pred_fallthru
          _
      $region40: #{tpu_custom_call.1} parent=5 // pred_fallthru
        _
    $region6: #{tpu_custom_call.1} parent=1 // loop_footer
      %s18 = sadd.s32 1, %s14
    $region7: #{tpu_custom_call.1} parent=1 // loop_footer_branch
      %13 = sbr.rel target = $region3
    $region8: #{tpu_custom_call.1} parent=1 // loop_exit
      _
    %1186 = vsyncpa [#allocation3], 1
    %s1187 = scalar_lea.sflag [#allocation3], 1
    %1188 = vsyncpa %s1187, 1
    %1189 = vsyncpa [#allocation4], 1
    %s1190 = scalar_lea.sflag [#allocation4], 1
    %1191 = vsyncpa %s1190, 1

</llo_original>
